<compile_context>
chip_gen: v5e
topology: v5e:2x2
jax: 0.10.0
libtpu: 0.0.40
codegen_flags: <defaults>
</compile_context>

<pallas_src>
import jax
import jax.numpy as jnp
from jax import lax
from jax.experimental import pallas as pl
from jax.experimental.pallas import tpu as pltpu


def _round_up(x, m):
    return (x + m - 1) // m * m


def _cdiv(a, b):
    return -(-a // b)


def _pick_tile(dim_padded, preferred):
    """Largest multiple of 128 <= preferred that evenly divides dim_padded
    (dim_padded is itself a multiple of 128)."""
    t = min(_round_up(preferred, 128), dim_padded)
    while dim_padded % t:
        t -= 128
    return t


def _lora_kernel(x_ref, w_ref, xa_ref, b_ref, bias_ref, o_ref, acc_ref):
    k = pl.program_id(2)

    @pl.when(k == 0)
    def _():
        acc_ref[...] = jnp.zeros_like(acc_ref)

    # x @ W.T with W in native (output_dim, input_dim) layout: contract dim 1
    # of both operands -> no materialized transpose, f32 accumulation.
    acc_ref[...] += lax.dot_general(
        x_ref[...], w_ref[...],
        dimension_numbers=(((1,), (1,)), ((), ())),
        preferred_element_type=jnp.float32)

    @pl.when(k == pl.num_programs(2) - 1)
    def _():
        # LoRA epilogue: (x @ A) @ B + bias, with x @ A precomputed once.
        lora = jnp.dot(xa_ref[...], b_ref[...],
                       preferred_element_type=jnp.float32)
        o_ref[...] = (acc_ref[...] + lora + bias_ref[...]).astype(o_ref.dtype)


def prepare_lora_params(A, B, weight, bias):
    """Pad + cast the parameters ONCE at model-load time (not per call).

    A: (input_dim, rank); B: (rank, output_dim);
    weight: (output_dim, input_dim); bias: (output_dim,).
    """
    output_dim, input_dim = weight.shape
    rank = A.shape[1]
    Kp = _round_up(input_dim, 128)
    Np = _round_up(output_dim, 128)
    Rp = _round_up(rank, 128)   # lane-pad rank; zero padding is exact
    cdt = jnp.bfloat16
    wp = jnp.zeros((Np, Kp), cdt).at[:output_dim, :input_dim].set(weight.astype(cdt))
    ap = jnp.zeros((Kp, Rp), cdt).at[:input_dim, :rank].set(A.astype(cdt))
    bp = jnp.zeros((Rp, Np), cdt).at[:rank, :output_dim].set(B.astype(cdt))
    biasp = jnp.zeros((1, Np), jnp.float32).at[0, :output_dim].set(
        bias.astype(jnp.float32))
    return dict(weight=wp, A=ap, B=bp, bias=biasp,
                output_dim=output_dim, input_dim=input_dim)


def lora_forward(x, params, *, bm_max=512, bn=512, bk=512,
                 out_dtype=jnp.float32):
    """x: (batch, input_dim) -> (batch, output_dim).

    out_dtype=jnp.bfloat16 halves output HBM traffic when the consumer
    accepts it (bm is always a multiple of 16, so bf16 (16,128) packing holds).
    """
    batch, input_dim = x.shape
    wp, ap, bp, biasp = params["weight"], params["A"], params["B"], params["bias"]
    output_dim = params["output_dim"]
    assert input_dim == params["input_dim"]
    Np, Kp = wp.shape
    Rp = ap.shape[1]

    # --- M tiling: one tile covering the whole (padded) batch when small,
    # otherwise evenly-sized tiles (no nearly-empty trailing tile).
    Mp16 = _round_up(batch, 16)
    n_m = _cdiv(Mp16, max(16, _round_up(bm_max, 16)))
    bm = _round_up(_cdiv(Mp16, n_m), 16)
    Mp = bm * n_m

    # --- N / K tiles: multiples of 128 that evenly divide the padded dims.
    bk = _pick_tile(Kp, bk)
    bn = _pick_tile(Np, bn)
    # v7x megacore: if the whole batch is a single "parallel" M tile, make
    # sure the j axis has >= 2 tiles so both TensorCores get work.
    if n_m == 1 and Np // bn < 2 and Np >= 256:
        half = (Np // 2) // 128 * 128
        if half >= 128:
            bn = _pick_tile(Np, half)

    # --- per-call input prep: cast x, pad only if actually needed.
    xb = x.astype(jnp.bfloat16)
    if (Mp, Kp) != (batch, input_dim):
        xp = jnp.zeros((Mp, Kp), jnp.bfloat16).at[:batch, :input_dim].set(xb)
    else:
        xp = xb

    # --- hoisted low-rank projection: x @ A computed exactly ONCE (tiny
    # (Mp, Rp) array), instead of once per (j, k) grid step inside the kernel.
    xa = jnp.dot(xp, ap, preferred_element_type=jnp.float32).astype(jnp.bfloat16)

    grid = (Mp // bm, Np // bn, Kp // bk)

    out = pl.pallas_call(
        _lora_kernel,
        out_shape=jax.ShapeDtypeStruct((Mp, Np), out_dtype),
        grid_spec=pltpu.PrefetchScalarGridSpec(
            num_scalar_prefetch=0,
            grid=grid,
            in_specs=[
                pl.BlockSpec((bm, bk), lambda i, j, k: (i, k)),   # x
                # If profiling still shows exposed DMA on the W stream, deepen
                # with pipeline_mode=pl.Buffered(3) here (VMEM permitting).
                pl.BlockSpec((bn, bk), lambda i, j, k: (j, k)),   # weight
                pl.BlockSpec((bm, Rp), lambda i, j, k: (i, 0)),   # x @ A (precomputed)
                pl.BlockSpec((Rp, bn), lambda i, j, k: (0, j)),   # B
                pl.BlockSpec((1, bn), lambda i, j, k: (0, j)),    # bias
            ],
            out_specs=pl.BlockSpec((bm, bn), lambda i, j, k: (i, j)),
            scratch_shapes=[
                pltpu.VMEM((bm, bn), jnp.float32),  # f32 accumulator of x @ W.T
            ],
        ),
        compiler_params=pltpu.CompilerParams(
            dimension_semantics=("parallel", "parallel", "arbitrary"),
            # Worst-case tile footprint (bm=bn=bk=512, Rp=128, double-buffered
            # inputs + f32 acc/out) is ~8 MiB -> fits v5e/v6e (128 MiB) and
            # v7x (64 MiB) with headroom under this explicit limit.
            vmem_limit_bytes=32 * 1024 * 1024),
    )(xp, wp, xa, bp, biasp)

    return out[:batch, :output_dim]


def _orthogonal_init(key, shape, dtype=jnp.float32):
    """Deterministic stand-in for nn.init.orthogonal_: QR of a Gaussian."""
    rows, cols = shape
    flat = jax.random.normal(key, (max(rows, cols), min(rows, cols)), dtype)
    q, r = jnp.linalg.qr(flat)
    q = q * jnp.sign(jnp.diag(r))[None, :]
    if rows < cols:
        q = q.T
    return q[:rows, :cols].astype(dtype)


if __name__ == "__main__":
    # Small shapes consistent with the module: batch=8, input_dim=32,
    # output_dim=32, rank=4.
    batch, input_dim, output_dim, rank = 8, 32, 32, 4

    key = jax.random.PRNGKey(0)
    k_x, k_a, k_b, k_w = jax.random.split(key, 4)

    x = jax.random.normal(k_x, (batch, input_dim), jnp.float32)
    A = _orthogonal_init(k_a, (input_dim, rank))       # nn.init.orthogonal_
    B = _orthogonal_init(k_b, (rank, output_dim))      # nn.init.orthogonal_
    weight = jax.random.normal(k_w, (output_dim, input_dim), jnp.float32)
    bias = jnp.zeros((output_dim,), jnp.float32)

    params = prepare_lora_params(A, B, weight, bias)   # one-time pad + cast
    out = lora_forward(x, params)
    out = jax.block_until_ready(out)

    # Reference with the same bf16-rounded operands (dropout eval = identity).
    # NOTE: operands are deliberately bf16 for the MXU; documented dtype choice.
    xb = x.astype(jnp.bfloat16).astype(jnp.float32)
    wb = weight.astype(jnp.bfloat16).astype(jnp.float32)
    ab = A.astype(jnp.bfloat16).astype(jnp.float32)
    bb = B.astype(jnp.bfloat16).astype(jnp.float32)
    ref = xb @ wb.T + (xb @ ab) @ bb + bias

    assert out.shape == (batch, output_dim)
    assert jnp.allclose(out, ref, atol=2e-2, rtol=2e-2), float(
        jnp.max(jnp.abs(out - ref)))

    print("KERNEL_OK")
</pallas_src>

<mosaic_0001>
module attributes {stable_mosaic.version = 11 : i64} {
  func.func @_lora_kernel(%arg0: i32, %arg1: i32, %arg2: i32, %arg3: memref<16x128xbf16, #tpu.memory_space<vmem>>, %arg4: memref<128x128xbf16, #tpu.memory_space<vmem>>, %arg5: memref<16x128xbf16, #tpu.memory_space<vmem>>, %arg6: memref<128x128xbf16, #tpu.memory_space<vmem>>, %arg7: memref<1x128xf32, #tpu.memory_space<vmem>>, %arg8: memref<16x128xf32, #tpu.memory_space<vmem>>, %arg9: memref<16x128xf32, #tpu.memory_space<vmem>>) attributes {dimension_semantics = [#tpu.dimension_semantics<parallel>, #tpu.dimension_semantics<parallel>, #tpu.dimension_semantics<arbitrary>], iteration_bounds = array<i64: 1, 1, 1>, scalar_prefetch = 0 : i64, scratch_operands = 1 : i64, tpu.core_type = #tpu.core_type<tc>, window_params = [{transform_indices = @transform_0, window_bounds = array<i64: 16, 128>}, {transform_indices = @transform_1, window_bounds = array<i64: 128, 128>}, {transform_indices = @transform_2, window_bounds = array<i64: 16, 128>}, {transform_indices = @transform_3, window_bounds = array<i64: 128, 128>}, {transform_indices = @transform_4, window_bounds = array<i64: 1, 128>}, {transform_indices = @transform_5, window_bounds = array<i64: 16, 128>}]} {
    %c0_i32 = arith.constant 0 : i32
    %0 = arith.cmpi eq, %arg2, %c0_i32 : i32
    %1 = arith.extui %0 : i1 to i32
    %c0_i32_0 = arith.constant 0 : i32
    %2 = arith.cmpi ne, %1, %c0_i32_0 : i32
    scf.if %2 {
      %cst_10 = arith.constant 0.000000e+00 : f32
      %12 = vector.broadcast %cst_10 : f32 to vector<16x128xf32>
      %c0_11 = arith.constant 0 : index
      %c0_12 = arith.constant 0 : index
      %13 = vector.load %arg9[%c0_11, %c0_12] : memref<16x128xf32, #tpu.memory_space<vmem>>, vector<16x128xf32>
      tpu.vector_store %arg9[%c0_11, %c0_12], %12 {strides = array<i32>} : memref<16x128xf32, #tpu.memory_space<vmem>>, vector<16x128xf32>,
    } else {
    }
    %c0 = arith.constant 0 : index
    %c0_1 = arith.constant 0 : index
    %3 = vector.load %arg9[%c0, %c0_1] : memref<16x128xf32, #tpu.memory_space<vmem>>, vector<16x128xf32>
    %c0_2 = arith.constant 0 : index
    %c0_3 = arith.constant 0 : index
    %4 = vector.load %arg3[%c0_2, %c0_3] : memref<16x128xbf16, #tpu.memory_space<vmem>>, vector<16x128xbf16>
    %c0_4 = arith.constant 0 : index
    %c0_5 = arith.constant 0 : index
    %5 = vector.load %arg4[%c0_4, %c0_5] : memref<128x128xbf16, #tpu.memory_space<vmem>>, vector<128x128xbf16>
    %cst = arith.constant dense<0.000000e+00> : vector<16x128xf32>
    %6 = tpu.matmul %4, %5, %cst {dimension_numbers = #tpu.dot_dimension_numbers<[1], [1], [0], [0], [0, 0, 1, 0], [], []>} : vector<16x128xbf16>, vector<128x128xbf16>, vector<16x128xf32> -> vector<16x128xf32>
    %7 = arith.addf %3, %6 : vector<16x128xf32>
    %c0_6 = arith.constant 0 : index
    %c0_7 = arith.constant 0 : index
    %8 = vector.load %arg9[%c0_6, %c0_7] : memref<16x128xf32, #tpu.memory_space<vmem>>, vector<16x128xf32>
    tpu.vector_store %arg9[%c0_6, %c0_7], %7 {strides = array<i32>} : memref<16x128xf32, #tpu.memory_space<vmem>>, vector<16x128xf32>,
    %c0_i32_8 = arith.constant 0 : i32
    %9 = arith.cmpi eq, %arg2, %c0_i32_8 : i32
    %10 = arith.extui %9 : i1 to i32
    %c0_i32_9 = arith.constant 0 : i32
    %11 = arith.cmpi ne, %10, %c0_i32_9 : i32
    scf.if %11 {
      %c0_10 = arith.constant 0 : index
      %c0_11 = arith.constant 0 : index
      %12 = vector.load %arg5[%c0_10, %c0_11] : memref<16x128xbf16, #tpu.memory_space<vmem>>, vector<16x128xbf16>
      %c0_12 = arith.constant 0 : index
      %c0_13 = arith.constant 0 : index
      %13 = vector.load %arg6[%c0_12, %c0_13] : memref<128x128xbf16, #tpu.memory_space<vmem>>, vector<128x128xbf16>
      %cst_14 = arith.constant dense<0.000000e+00> : vector<16x128xf32>
      %14 = tpu.matmul %12, %13, %cst_14 {dimension_numbers = #tpu.dot_dimension_numbers<[1], [0], [0], [1], [0, 0, 1, 1], [], []>} : vector<16x128xbf16>, vector<128x128xbf16>, vector<16x128xf32> -> vector<16x128xf32>
      %c0_15 = arith.constant 0 : index
      %c0_16 = arith.constant 0 : index
      %15 = vector.load %arg9[%c0_15, %c0_16] : memref<16x128xf32, #tpu.memory_space<vmem>>, vector<16x128xf32>
      %16 = arith.addf %15, %14 : vector<16x128xf32>
      %c0_17 = arith.constant 0 : index
      %c0_18 = arith.constant 0 : index
      %17 = vector.load %arg7[%c0_17, %c0_18] : memref<1x128xf32, #tpu.memory_space<vmem>>, vector<1x128xf32>
      %18 = vector.broadcast %17 : vector<1x128xf32> to vector<16x128xf32>
      %19 = arith.addf %16, %18 : vector<16x128xf32>
      %c0_19 = arith.constant 0 : index
      %c0_20 = arith.constant 0 : index
      %20 = vector.load %arg8[%c0_19, %c0_20] : memref<16x128xf32, #tpu.memory_space<vmem>>, vector<16x128xf32>
      tpu.vector_store %arg8[%c0_19, %c0_20], %19 {strides = array<i32>} : memref<16x128xf32, #tpu.memory_space<vmem>>, vector<16x128xf32>,
    } else {
    }
    return
  }
  func.func @transform_0(%arg0: i32, %arg1: i32, %arg2: i32) -> (i32, i32) {
    %c0_i32 = arith.constant 0 : i32
    return %arg0, %arg2 : i32, i32
  }
  func.func @transform_1(%arg0: i32, %arg1: i32, %arg2: i32) -> (i32, i32) {
    %c0_i32 = arith.constant 0 : i32
    return %arg1, %arg2 : i32, i32
  }
  func.func @transform_2(%arg0: i32, %arg1: i32, %arg2: i32) -> (i32, i32) {
    %c0_i32 = arith.constant 0 : i32
    %c0_i32_0 = arith.constant 0 : i32
    return %arg0, %c0_i32 : i32, i32
  }
  func.func @transform_3(%arg0: i32, %arg1: i32, %arg2: i32) -> (i32, i32) {
    %c0_i32 = arith.constant 0 : i32
    %c0_i32_0 = arith.constant 0 : i32
    return %c0_i32, %arg1 : i32, i32
  }
  func.func @transform_4(%arg0: i32, %arg1: i32, %arg2: i32) -> (i32, i32) {
    %c0_i32 = arith.constant 0 : i32
    %c0_i32_0 = arith.constant 0 : i32
    return %c0_i32, %arg1 : i32, i32
  }
  func.func @transform_5(%arg0: i32, %arg1: i32, %arg2: i32) -> (i32, i32) {
    %c0_i32 = arith.constant 0 : i32
    return %arg0, %arg1 : i32, i32
  }
}

</mosaic_0001>

<llo_original>
// kernel: tpu_custom_call.1
$region0: #{tpu_custom_call.1}
  #allocation0 [shape = 'u32[]', space=smem, size = 0x4, offset = 0x4, fixed_abs, tag = 'smem constant byte address 0x4 - core index']
  #allocation1 [shape = 'u32[72,128]{1,0:T(1,128)}', space=vmem, size = 0x9000, scoped, tag = 'internal scratch']
  #allocation2 [shape = 'f32[16,128]{1,0:T(8,128)}', space=vmem, size = 0x2000, scoped, tag = 'scratch operand']
  %s0 = inlined_call_operand.hbm [shape: bf16[16,128], index: 0, kind: input, shape index: {}]
  %s1 = inlined_call_operand.hbm [shape: bf16[128,128], index: 1, kind: input, shape index: {}]
  %s2 = inlined_call_operand.hbm [shape: bf16[16,128], index: 2, kind: input, shape index: {}]
  %s3 = inlined_call_operand.hbm [shape: bf16[128,128], index: 3, kind: input, shape index: {}]
  %s4 = inlined_call_operand.vmem [shape: f32[1,128], index: 4, kind: input, shape index: {}]
  %s5 = inlined_call_operand.hbm [shape: f32[16,128], index: 5, kind: output, shape index: {}]
  %s6 = sld [smem:[#allocation0]]
  $region54: #{tpu_custom_call.1} parent=0
    _
  %s8 = ssub.s32 1, %s6
  %s9 = scalar_select 0, %s8, %s6
  $region1: #{tpu_custom_call.1} parent=0
    #allocation3 [shape = 'u8[4096]{0}', space=vmem, size = 0x1000, scoped, tag = 'input window, operand 0, single buffered']
    #allocation4 [shape = 's32[1]{0}', space=sflag, size = 0x4, scoped, tag = 'scoped memory for tpu_custom_call.1']
    #allocation5 [shape = 's32[1]{0}', space=sflag, size = 0x4, scoped, tag = 'scoped memory for tpu_custom_call.1']
    #allocation6 [shape = 'u8[32768]{0}', space=vmem, size = 0x8000, scoped, tag = 'input window, operand 1, single buffered']
    #allocation7 [shape = 's32[1]{0}', space=sflag, size = 0x4, scoped, tag = 'scoped memory for tpu_custom_call.1']
    #allocation8 [shape = 'u8[4096]{0}', space=vmem, size = 0x1000, scoped, tag = 'input window, operand 2, single buffered']
    #allocation9 [shape = 'u8[32768]{0}', space=vmem, size = 0x8000, scoped, tag = 'input window, operand 3, single buffered']
    #allocation10 [shape = 's32[1]{0}', space=sflag, size = 0x4, scoped, tag = 'scoped memory for tpu_custom_call.1']
    #allocation11 [shape = 'u8[8192]{0}', space=vmem, size = 0x2000, scoped, tag = 'output window, operand 0, single buffered']
    %10 = vsyncpa [#allocation4], 0
    %11 = vsyncpa [#allocation7], 0
    %12 = vsyncpa [#allocation10], 0
    %13 = vsyncpa [#allocation5], 0
    // Predicated region
    $region2: #{tpu_custom_call.1} parent=1 // pred_check
      _
    $region3: #{tpu_custom_call.1} parent=1 // pred_check_branch
      %15 = sbr.rel (0) target = $region5
    $region4: #{tpu_custom_call.1} parent=1 // pred_region
      %17 = vsyncadd [#allocation4], 0
      %s18 = sshll.u32 %s0, 4
      %s19 = int_to_ptr.hbm [resolvable:$true] %s18
      %s20 = sshll.u32 [#allocation3], 4
      %s21 = int_to_ptr.vmem [resolvable:$true] %s20
      %26 = dma.hbm_to_vmem [thread:$0]  %s19, 128, %s21, [#allocation4], 64, 64, 4
    $region5: #{tpu_custom_call.1} parent=1 // pred_fallthru
      _
    // Predicated region
    $region6: #{tpu_custom_call.1} parent=1 // pred_check
      _
    $region7: #{tpu_custom_call.1} parent=1 // pred_check_branch
      %28 = sbr.rel (0) target = $region9
    $region8: #{tpu_custom_call.1} parent=1 // pred_region
      %30 = vsyncadd [#allocation7], 0
      %s31 = sshll.u32 %s1, 4
      %s32 = int_to_ptr.hbm [resolvable:$true] %s31
      %s33 = sshll.u32 [#allocation6], 4
      %s34 = int_to_ptr.vmem [resolvable:$true] %s33
      %39 = dma.hbm_to_vmem [thread:$0]  %s32, 1024, %s34, [#allocation7], 64, 64, 4
    $region9: #{tpu_custom_call.1} parent=1 // pred_fallthru
      _
    // Predicated region
    $region10: #{tpu_custom_call.1} parent=1 // pred_check
      _
    $region11: #{tpu_custom_call.1} parent=1 // pred_check_branch
      %41 = sbr.rel (0) target = $region13
    $region12: #{tpu_custom_call.1} parent=1 // pred_region
      %43 = vsyncadd [#allocation7], 0
      %s44 = sshll.u32 %s2, 4
      %s45 = int_to_ptr.hbm [resolvable:$true] %s44
      %s46 = sshll.u32 [#allocation8], 4
      %s47 = int_to_ptr.vmem [resolvable:$true] %s46
      %52 = dma.hbm_to_vmem [thread:$0]  %s45, 128, %s47, [#allocation7], 64, 64, 4
    $region13: #{tpu_custom_call.1} parent=1 // pred_fallthru
      _
    // Predicated region
    $region14: #{tpu_custom_call.1} parent=1 // pred_check
      _
    $region15: #{tpu_custom_call.1} parent=1 // pred_check_branch
      %54 = sbr.rel (0) target = $region17
    $region16: #{tpu_custom_call.1} parent=1 // pred_region
      %56 = vsyncadd [#allocation10], 0
      %s57 = sshll.u32 %s3, 4
      %s58 = int_to_ptr.hbm [resolvable:$true] %s57
      %s59 = sshll.u32 [#allocation9], 4
      %s60 = int_to_ptr.vmem [resolvable:$true] %s59
      %65 = dma.hbm_to_vmem [thread:$0]  %s58, 1024, %s60, [#allocation10], 64, 64, 4
    $region17: #{tpu_custom_call.1} parent=1 // pred_fallthru
      _
    // Predicated region
    $region18: #{tpu_custom_call.1} parent=1 // pred_check
      _
    $region19: #{tpu_custom_call.1} parent=1 // pred_check_branch
      %67 = sbr.rel (0) target = $region21
    $region20: #{tpu_custom_call.1} parent=1 // pred_region
      _
    $region21: #{tpu_custom_call.1} parent=1 // pred_fallthru
      _
    // Predicated region
    $region22: #{tpu_custom_call.1} parent=1 // pred_check
      _
    $region23: #{tpu_custom_call.1} parent=1 // pred_check_branch
      %69 = sbr.rel (0) target = $region25
    $region24: #{tpu_custom_call.1} parent=1 // pred_region
      %71 = dma.done [#allocation4], 128
    $region25: #{tpu_custom_call.1} parent=1 // pred_fallthru
      _
    // Predicated region
    $region26: #{tpu_custom_call.1} parent=1 // pred_check
      _
    $region27: #{tpu_custom_call.1} parent=1 // pred_check_branch
      %73 = sbr.rel (0) target = $region29
    $region28: #{tpu_custom_call.1} parent=1 // pred_region
      %75 = dma.done [#allocation7], 1024
    $region29: #{tpu_custom_call.1} parent=1 // pred_fallthru
      _
    // Predicated region
    $region30: #{tpu_custom_call.1} parent=1 // pred_check
      _
    $region31: #{tpu_custom_call.1} parent=1 // pred_check_branch
      %77 = sbr.rel (0) target = $region33
    $region32: #{tpu_custom_call.1} parent=1 // pred_region
      %79 = dma.done [#allocation7], 128
    $region33: #{tpu_custom_call.1} parent=1 // pred_fallthru
      _
    // Predicated region
    $region34: #{tpu_custom_call.1} parent=1 // pred_check
      _
    $region35: #{tpu_custom_call.1} parent=1 // pred_check_branch
      %81 = sbr.rel (0) target = $region37
    $region36: #{tpu_custom_call.1} parent=1 // pred_region
      %83 = dma.done [#allocation10], 1024
    $region37: #{tpu_custom_call.1} parent=1 // pred_fallthru
      _
    %p84 = scmp.eq.s32.totalorder 0, 0
    // Predicated region
    $region38: #{tpu_custom_call.1} parent=1 // pred_check
      %p85 = pneg %p84
    $region39: #{tpu_custom_call.1} parent=1 // pred_check_branch
      %87 = sbr.rel (%p85) target = $region41
    $region40: #{tpu_custom_call.1} parent=1 // pred_region
      %88 = vst [vmem:[#allocation2] sm:$0xff] 0.0
      %89 = vst [vmem:[#allocation2 + $0x8] sm:$0xff] 0.0
    $region41: #{tpu_custom_call.1} parent=1 // pred_fallthru
      _
    %v90 = vld [vmem:[#allocation2] sm:$0xff]
    %v91 = vld [vmem:[#allocation2 + $0x8] sm:$0xff]
    %v92 = vld [vmem:[#allocation3] sm:$0xf]
    %v93 = vld [vmem:[#allocation3 + $0x4] sm:$0xf]
    %v94 = vld [vmem:[#allocation6] sm:$0xf]
    %v95 = vld [vmem:[#allocation6 + $0x4] sm:$0xf]
    %v96 = vld [vmem:[#allocation6 + $0x8] sm:$0xf]
    %v97 = vld [vmem:[#allocation6 + $0xc] sm:$0xf]
    %v98 = vld [vmem:[#allocation6 + $0x10] sm:$0xf]
    %v99 = vld [vmem:[#allocation6 + $0x14] sm:$0xf]
    %v100 = vld [vmem:[#allocation6 + $0x18] sm:$0xf]
    %v101 = vld [vmem:[#allocation6 + $0x1c] sm:$0xf]
    %v102 = vld [vmem:[#allocation6 + $0x20] sm:$0xf]
    %v103 = vld [vmem:[#allocation6 + $0x24] sm:$0xf]
    %v104 = vld [vmem:[#allocation6 + $0x28] sm:$0xf]
    %v105 = vld [vmem:[#allocation6 + $0x2c] sm:$0xf]
    %v106 = vld [vmem:[#allocation6 + $0x30] sm:$0xf]
    %v107 = vld [vmem:[#allocation6 + $0x34] sm:$0xf]
    %v108 = vld [vmem:[#allocation6 + $0x38] sm:$0xf]
    %v109 = vld [vmem:[#allocation6 + $0x3c] sm:$0xf]
    %v112 = vunpack.c.l.b16 %v92
    %v113 = vunpack.c.l.b16 %v93
    %v114 = vpack.c.b16 %v113, %v112
    %v132 = vunpack.c.l.b16 %v94
    %v133 = vunpack.c.l.b16 %v95
    %v134 = vunpack.c.l.b16 %v96
    %v135 = vunpack.c.l.b16 %v97
    %v136 = vunpack.c.l.b16 %v98
    %v137 = vunpack.c.l.b16 %v99
    %v138 = vunpack.c.l.b16 %v100
    %v139 = vunpack.c.l.b16 %v101
    %v140 = vunpack.c.l.b16 %v102
    %v141 = vunpack.c.l.b16 %v103
    %v142 = vunpack.c.l.b16 %v104
    %v143 = vunpack.c.l.b16 %v105
    %v144 = vunpack.c.l.b16 %v106
    %v145 = vunpack.c.l.b16 %v107
    %v146 = vunpack.c.l.b16 %v108
    %v147 = vunpack.c.l.b16 %v109
    %v148 = vpack.c.b16 %v133, %v132
    %v149 = vpack.c.b16 %v135, %v134
    %v150 = vpack.c.b16 %v137, %v136
    %v151 = vpack.c.b16 %v139, %v138
    %v152 = vpack.c.b16 %v141, %v140
    %v153 = vpack.c.b16 %v143, %v142
    %v154 = vpack.c.b16 %v145, %v144
    %v155 = vpack.c.b16 %v147, %v146
    %164 = vmatpush.bf16.xpose.msra.mxu0 %v155
    %165 = vmatpush.bf16.xpose.msra.mxu0 %v154
    %166 = vmatpush.bf16.xpose.msra.mxu0 %v153
    %167 = vmatpush.bf16.xpose.msra.mxu0 %v152
    %168 = vmatpush.bf16.xpose.msra.mxu0 %v151
    %169 = vmatpush.bf16.xpose.msra.mxu0 %v150
    %170 = vmatpush.bf16.xpose.msra.mxu0 %v149
    %171 = vmatpush.bf16.xpose.msra.mxu0 %v148
    %172 = vmatmul.bf16.gmra.mxu0 %v114
    %v173 = vpop.f32.mrf.mxu0
    %v174 = vadd.f32 0.0, %v173
    %v175 = vpop.f32.mrf.mxu0
    %v176 = vadd.f32 0.0, %v175
    %177 = vdwg.mxu0
    %v178 = vadd.f32 %v90, %v174
    %v179 = vadd.f32 %v91, %v176
    %180 = vst [vmem:[#allocation2] sm:$0xff] %v178
    %181 = vst [vmem:[#allocation2 + $0x8] sm:$0xff] %v179
    // Predicated region
    $region42: #{tpu_custom_call.1} parent=1 // pred_check
      %p182 = pneg %p84
    $region43: #{tpu_custom_call.1} parent=1 // pred_check_branch
      %184 = sbr.rel (%p182) target = $region45
    $region44: #{tpu_custom_call.1} parent=1 // pred_region
      %v185 = vld [vmem:[#allocation8] sm:$0xf]
      %v186 = vld [vmem:[#allocation8 + $0x4] sm:$0xf]
      %v187 = vld [vmem:[#allocation9] sm:$0xf]
      %v188 = vld [vmem:[#allocation9 + $0x4] sm:$0xf]
      %v189 = vld [vmem:[#allocation9 + $0x8] sm:$0xf]
      %v190 = vld [vmem:[#allocation9 + $0xc] sm:$0xf]
      %v191 = vld [vmem:[#allocation9 + $0x10] sm:$0xf]
      %v192 = vld [vmem:[#allocation9 + $0x14] sm:$0xf]
      %v193 = vld [vmem:[#allocation9 + $0x18] sm:$0xf]
      %v194 = vld [vmem:[#allocation9 + $0x1c] sm:$0xf]
      %v195 = vld [vmem:[#allocation9 + $0x20] sm:$0xf]
      %v196 = vld [vmem:[#allocation9 + $0x24] sm:$0xf]
      %v197 = vld [vmem:[#allocation9 + $0x28] sm:$0xf]
      %v198 = vld [vmem:[#allocation9 + $0x2c] sm:$0xf]
      %v199 = vld [vmem:[#allocation9 + $0x30] sm:$0xf]
      %v200 = vld [vmem:[#allocation9 + $0x34] sm:$0xf]
      %v201 = vld [vmem:[#allocation9 + $0x38] sm:$0xf]
      %v202 = vld [vmem:[#allocation9 + $0x3c] sm:$0xf]
      %v205 = vunpack.c.l.b16 %v185
      %v206 = vunpack.c.l.b16 %v186
      %v207 = vpack.c.b16 %v206, %v205
      %v225 = vunpack.c.l.b16 %v187
      %v226 = vunpack.c.l.b16 %v188
      %v227 = vunpack.c.l.b16 %v189
      %v228 = vunpack.c.l.b16 %v190
      %v229 = vunpack.c.l.b16 %v191
      %v230 = vunpack.c.l.b16 %v192
      %v231 = vunpack.c.l.b16 %v193
      %v232 = vunpack.c.l.b16 %v194
      %v233 = vunpack.c.l.b16 %v195
      %v234 = vunpack.c.l.b16 %v196
      %v235 = vunpack.c.l.b16 %v197
      %v236 = vunpack.c.l.b16 %v198
      %v237 = vunpack.c.l.b16 %v199
      %v238 = vunpack.c.l.b16 %v200
      %v239 = vunpack.c.l.b16 %v201
      %v240 = vunpack.c.l.b16 %v202
      %v241 = vpack.c.b16 %v226, %v225
      %v242 = vpack.c.b16 %v228, %v227
      %v243 = vpack.c.b16 %v230, %v229
      %v244 = vpack.c.b16 %v232, %v231
      %v245 = vpack.c.b16 %v234, %v233
      %v246 = vpack.c.b16 %v236, %v235
      %v247 = vpack.c.b16 %v238, %v237
      %v248 = vpack.c.b16 %v240, %v239
      %257 = vmatpush.bf16.msra.mxu0 %v248
      %258 = vmatpush.bf16.msra.mxu0 %v247
      %259 = vmatpush.bf16.msra.mxu0 %v246
      %260 = vmatpush.bf16.msra.mxu0 %v245
      %261 = vmatpush.bf16.msra.mxu0 %v244
      %262 = vmatpush.bf16.msra.mxu0 %v243
      %263 = vmatpush.bf16.msra.mxu0 %v242
      %264 = vmatpush.bf16.msra.mxu0 %v241
      %265 = vmatmul.bf16.gmra.mxu0 %v207
      %v266 = vpop.f32.mrf.mxu0
      %v267 = vadd.f32 0.0, %v266
      %v268 = vpop.f32.mrf.mxu0
      %v269 = vadd.f32 0.0, %v268
      %270 = vdwg.mxu0
      %v271 = vld [vmem:[#allocation2] sm:$0xff]
      %v272 = vld [vmem:[#allocation2 + $0x8] sm:$0xff]
      %v273 = vadd.f32 %v271, %v267
      %v274 = vadd.f32 %v272, %v269
      %v275 = vld [vmem:[%s4] sm:$0x1]
      %v277 = vperm.slane %v275, 0
      %v279 = vadd.f32 %v273, %v277
      %v280 = vadd.f32 %v274, %v277
      %281 = vst [vmem:[#allocation11] sm:$0xff] %v279
      %282 = vst [vmem:[#allocation11 + $0x8] sm:$0xff] %v280
    $region45: #{tpu_custom_call.1} parent=1 // pred_fallthru
      _
    // Predicated region
    $region46: #{tpu_custom_call.1} parent=1 // pred_check
      _
    $region47: #{tpu_custom_call.1} parent=1 // pred_check_branch
      %284 = sbr.rel (0) target = $region49
    $region48: #{tpu_custom_call.1} parent=1 // pred_region
      %286 = vsyncadd [#allocation5], 0
      %s287 = sshll.u32 [#allocation11], 4
      %s288 = int_to_ptr.vmem [resolvable:$true] %s287
      %s289 = sshll.u32 %s5, 4
      %s290 = int_to_ptr.hbm [resolvable:$true] %s289
      %295 = dma.vmem_to_hbm [thread:$0]  %s288, 256, %s290, [#allocation5], 128, 128, 8
    $region49: #{tpu_custom_call.1} parent=1 // pred_fallthru
      _
    // Predicated region
    $region50: #{tpu_custom_call.1} parent=1 // pred_check
      _
    $region51: #{tpu_custom_call.1} parent=1 // pred_check_branch
      %297 = sbr.rel (0) target = $region53
    $region52: #{tpu_custom_call.1} parent=1 // pred_region
      %299 = dma.done [#allocation5], 256
    $region53: #{tpu_custom_call.1} parent=1 // pred_fallthru
      _
    %300 = vsyncpa [#allocation4], 1
    %301 = vsyncpa [#allocation7], 1
    %302 = vsyncpa [#allocation10], 1
    %303 = vsyncpa [#allocation5], 1

</llo_original>
